<compile_context>
chip_gen: v7x
topology: tpu7x:2x2x1
jax: 0.10.0
libtpu: 0.0.40
codegen_flags: <defaults>
</compile_context>

<pallas_src>
import math
import jax
import jax.numpy as jnp
from jax.experimental import pallas as pl
from jax.experimental.pallas import tpu as pltpu


def _round_up(a, b):
    return ((a + b - 1) // b) * b


def _make_conv_kernel(kh, kw, stride, oh, ow, tb, c, m_chunk):
    """Build the per-(batch-tile, oc-tile) kernel body (all sizes static)."""
    s = stride
    kk = kh * kw
    m_total = tb * oh * ow

    def kernel(x_ref, w_ref, o_ref, lhs_ref):
        # x_ref:   (TB, s*s, HPs, WPs, C)  bf16  phase-decomposed padded input
        # w_ref:   (KH*KW*C, TN)           bf16  im2col-ordered filters (OC tile)
        # o_ref:   (1, TB*OH*OW, TN)             output tile (lane-dense)
        # lhs_ref: (TB*OH*OW, KH*KW*C)     bf16  persistent VMEM im2col scratch

        # Build the im2col LHS once per batch tile (inner OC-tile index == 0);
        # it is reused for every OC tile of this batch tile.
        @pl.when(pl.program_id(1) == 0)
        def _build_im2col():
            for ki in range(kh):
                for kj in range(kw):
                    # Tap (ki, kj) with stride s == unit-stride slice of phase
                    # (ki % s, kj % s) starting at (ki // s, kj // s).
                    phase = (ki % s) * s + (kj % s)
                    ai, aj = ki // s, kj // s
                    t = ki * kw + kj
                    patch = x_ref[:, phase, ai:ai + oh, aj:aj + ow, :]
                    lhs_ref[:, t * c:(t + 1) * c] = patch.reshape(m_total, c)

        # One fused MXU contraction per M chunk: K = KH*KW*C instead of KH*KW
        # tiny K=C matmuls.  Chunking M keeps the f32 accumulator well inside
        # the 64-vreg file (256 rows x 128 lanes x 4B = 128 KiB).
        w = w_ref[...]
        for m0 in range(0, m_total, m_chunk):
            m1 = min(m0 + m_chunk, m_total)
            o_ref[0, m0:m1, :] = jnp.dot(
                lhs_ref[m0:m1, :], w,
                preferred_element_type=jnp.float32).astype(o_ref.dtype)

    return kernel


def conv2d_pallas(x, weight, stride=1, padding=0, *, tn=128,
                  compute_dtype=jnp.bfloat16, out_dtype=jnp.float32,
                  target_m=512, m_chunk=256,
                  vmem_budget_bytes=40 * 1024 * 1024):
    """Forward pass of the custom Conv2d module.

    x      : (N, C, H, W)    float32 (NCHW, same as the PyTorch module)
    weight : (OC, C, KH, KW) float32 (OIHW, same as the PyTorch module)
    Returns (N, OC, OH, OW) with OH = (H - KH + 2p + s) // s (and same for W),
    matching Conv2d.calculate_output_size.
    """
    n, c, xh, xw = x.shape
    oc, wc, kh, kw = weight.shape
    assert wc == c
    s, p = int(stride), int(padding)
    oh = (xh - kh + 2 * p + s) // s
    ow = (xw - kw + 2 * p + s) // s
    kk = kh * kw

    # Pad the number of output columns computed in-kernel to a sublane multiple
    # so the per-tap merge (TB, OH, OWp, C) -> (TB*OH*OWp, C) is tile-aligned.
    ow_k = _round_up(ow, 8)

    hp, wp = xh + 2 * p, xw + 2 * p
    hp2 = _round_up(hp, s)
    hps = hp2 // s
    # Width phases must be wide enough for the padded output columns.
    wps = max(_round_up(wp, s) // s, (kw - 1) // s + ow_k)
    wp2 = wps * s

    # The static tap slices in the kernel rely on these.
    assert (kh - 1) // s + oh <= hps, (kh, s, oh, hps)
    assert (kw - 1) // s + ow_k <= wps, (kw, s, ow_k, wps)

    ocp = _round_up(oc, tn)
    n_oc_tiles = ocp // tn
    m_img = oh * ow_k
    out_bytes = jnp.dtype(out_dtype).itemsize

    # --- batch-tile (TB) selection -------------------------------------------
    def vmem_estimate(tb_):
        m_t = tb_ * m_img
        # Honest VMEM sizes (minor dim pads to 128 lanes, 2nd-minor to 16
        # sublanes for bf16); inputs/outputs are double-buffered by Pallas.
        in_blk = tb_ * s * s * hps * _round_up(wps, 16) * _round_up(c, 128) * 2
        w_blk = _round_up(kk * c, 16) * tn * 2
        o_blk = _round_up(m_t, 16) * tn * out_bytes
        scratch = _round_up(m_t, 16) * _round_up(kk * c, 128) * 2
        return 2 * in_blk + 2 * w_blk + 2 * o_blk + scratch

    tb = max(1, min(n, target_m // max(m_img, 1)))
    while tb > 1 and vmem_estimate(tb) > vmem_budget_bytes:
        tb -= 1
    # Keep >= 2 iterations on the "parallel" batch axis when possible so both
    # TensorCores of a v7x chip stay busy (v5e/v6e unaffected).
    if -(-n // tb) == 1 and n_oc_tiles == 1 and n > 1:
        tb = -(-n // 2)
    n_pad = _round_up(n, tb)
    num_b_tiles = n_pad // tb
    m_total = tb * m_img

    # --- glue: single pad + phase-decompose (space-to-depth by the stride) ---
    # No HBM im2col: activations are read ~1x; the KH*KW gather happens in VMEM.
    xx = x.astype(compute_dtype)
    xx = jnp.pad(xx, ((0, n_pad - n), (0, 0),
                      (p, hp2 - xh - p), (p, wp2 - xw - p)))
    xx = xx.transpose(0, 2, 3, 1)                         # (Np, HP2, WP2, C)
    xx = xx.reshape(n_pad, hps, s, wps, s, c)
    xx = xx.transpose(0, 2, 4, 1, 3, 5)                   # (Np, s, s, HPs, WPs, C)
    xx = xx.reshape(n_pad, s * s, hps, wps, c)

    # Weights: OIHW -> (KH*KW*C, OCp) in im2col (tap-major, channel-minor) order.
    w = weight.astype(compute_dtype).transpose(2, 3, 1, 0).reshape(kk * c, oc)
    if ocp != oc:
        w = jnp.pad(w, ((0, 0), (0, ocp - oc)))

    kernel = _make_conv_kernel(kh, kw, s, oh, ow_k, tb, c, m_chunk)

    est = vmem_estimate(tb)
    vmem_limit = int(min(100 * 1024 * 1024, max(32 * 1024 * 1024, 2 * est)))

    flops = 2 * n_pad * m_img * kk * c * ocp
    bytes_accessed = int(xx.size * xx.dtype.itemsize
                         + num_b_tiles * w.size * w.dtype.itemsize
                         + n_pad * m_img * ocp * out_bytes)

    out = pl.pallas_call(
        kernel,
        out_shape=jax.ShapeDtypeStruct((num_b_tiles, m_total, ocp), out_dtype),
        grid=(num_b_tiles, n_oc_tiles),
        in_specs=[
            # One batch tile of phase-decomposed input; constant along the
            # inner OC-tile axis -> fetched once per batch tile.
            pl.BlockSpec((tb, s * s, hps, wps, c),
                         lambda b, j: (b, 0, 0, 0, 0)),
            # One OC tile of the im2col-ordered weights.
            pl.BlockSpec((kk * c, tn), lambda b, j: (0, j)),
        ],
        out_specs=pl.BlockSpec((1, m_total, tn), lambda b, j: (b, 0, j)),
        scratch_shapes=[pltpu.VMEM((m_total, kk * c), compute_dtype)],
        compiler_params=pltpu.CompilerParams(
            # OC-tile axis is "arbitrary": the im2col scratch built at j == 0
            # is reused across it.
            dimension_semantics=("parallel", "arbitrary"),
            vmem_limit_bytes=vmem_limit,
        ),
        cost_estimate=pl.CostEstimate(
            flops=flops, transcendentals=0, bytes_accessed=bytes_accessed),
    )(xx, w)

    # --- glue: drop OW / OC / batch padding, back to NCHW --------------------
    out = out.reshape(n_pad, oh, ow_k, ocp)[:n, :, :ow, :oc]
    return out.transpose(0, 3, 1, 2)


def make_conv2d_weight(key, in_channels, out_channels, kernel_size):
    """Deterministic Xavier-like init matching Conv2d.create_kernel."""
    kh, kw = kernel_size
    xavier = 1.0 / math.sqrt(kh * kw)
    return jax.random.uniform(
        key, (out_channels, in_channels, kh, kw),
        minval=-xavier, maxval=xavier, dtype=jnp.float32,
    )


def _reference(x, weight, stride, padding):
    return jax.lax.conv_general_dilated(
        x, weight, window_strides=(stride, stride),
        padding=[(padding, padding), (padding, padding)],
        dimension_numbers=("NCHW", "OIHW", "NCHW"),
    )


if __name__ == "__main__":
    in_channels, out_channels = 4, 8
    kernel_size = (3, 3)

    key = jax.random.PRNGKey(0)
    kx, kw_ = jax.random.split(key)

    x = jax.random.normal(kx, (2, in_channels, 16, 16), dtype=jnp.float32)
    weight = make_conv2d_weight(kw_, in_channels, out_channels, kernel_size)

    # Config 1: stride 2, padding 1 (matches the module's typical usage).
    y = conv2d_pallas(x, weight, stride=2, padding=1)
    y = jax.block_until_ready(y)
    ref = _reference(x, weight, 2, 1)
    assert y.shape == (2, out_channels, 8, 8), y.shape
    assert jnp.allclose(y, ref, atol=5e-2, rtol=5e-2), (
        float(jnp.max(jnp.abs(y - ref))))

    # Config 2: stride 1, padding 0 (exercises the s == 1 / padded-OW path).
    y2 = conv2d_pallas(x, weight, stride=1, padding=0)
    y2 = jax.block_until_ready(y2)
    ref2 = _reference(x, weight, 1, 0)
    assert y2.shape == (2, out_channels, 14, 14), y2.shape
    assert jnp.allclose(y2, ref2, atol=5e-2, rtol=5e-2), (
        float(jnp.max(jnp.abs(y2 - ref2))))

    print("KERNEL_OK")
</pallas_src>

<mosaic_0001>
module attributes {stable_mosaic.version = 11 : i64} {
  func.func @kernel(%arg0: i32, %arg1: i32, %arg2: memref<1x4x9x9x4xbf16, #tpu.memory_space<vmem>>, %arg3: memref<36x128xbf16, #tpu.memory_space<vmem>>, %arg4: memref<1x64x128xf32, #tpu.memory_space<vmem>>, %arg5: memref<64x36xbf16, #tpu.memory_space<vmem>>) attributes {dimension_semantics = [#tpu.dimension_semantics<parallel>, #tpu.dimension_semantics<arbitrary>], iteration_bounds = array<i64: 2, 1>, scalar_prefetch = 0 : i64, scratch_operands = 1 : i64, tpu.core_type = #tpu.core_type<tc>, window_params = [{transform_indices = @transform_0, window_bounds = array<i64: 1, 4, 9, 9, 4>}, {transform_indices = @transform_1, window_bounds = array<i64: 36, 128>}, {transform_indices = @transform_2, window_bounds = array<i64: 1, 64, 128>}]} {
    %c0_i32 = arith.constant 0 : i32
    %0 = arith.cmpi eq, %arg1, %c0_i32 : i32
    %1 = arith.extui %0 : i1 to i32
    %c0_i32_0 = arith.constant 0 : i32
    %2 = arith.cmpi ne, %1, %c0_i32_0 : i32
    scf.if %2 {
      %c0_7 = arith.constant 0 : index
      %c0_8 = arith.constant 0 : index
      %c0_9 = arith.constant 0 : index
      %c0_10 = arith.constant 0 : index
      %c0_11 = arith.constant 0 : index
      %9 = vector.load %arg2[%c0_7, %c0_8, %c0_9, %c0_10, %c0_11] : memref<1x4x9x9x4xbf16, #tpu.memory_space<vmem>>, vector<1x1x8x8x4xbf16>
      %10 = vector.shape_cast %9 : vector<1x1x8x8x4xbf16> to vector<1x8x8x4xbf16>
      %11 = vector.shape_cast %10 : vector<1x8x8x4xbf16> to vector<64x4xbf16>
      %c0_12 = arith.constant 0 : index
      %c0_13 = arith.constant 0 : index
      %12 = vector.load %arg5[%c0_12, %c0_13] : memref<64x36xbf16, #tpu.memory_space<vmem>>, vector<64x4xbf16>
      tpu.vector_store %arg5[%c0_12, %c0_13], %11 {strides = array<i32>} : memref<64x36xbf16, #tpu.memory_space<vmem>>, vector<64x4xbf16>,
      %c0_14 = arith.constant 0 : index
      %c1 = arith.constant 1 : index
      %c0_15 = arith.constant 0 : index
      %c0_16 = arith.constant 0 : index
      %c0_17 = arith.constant 0 : index
      %13 = vector.load %arg2[%c0_14, %c1, %c0_15, %c0_16, %c0_17] : memref<1x4x9x9x4xbf16, #tpu.memory_space<vmem>>, vector<1x1x8x8x4xbf16>
      %14 = vector.shape_cast %13 : vector<1x1x8x8x4xbf16> to vector<1x8x8x4xbf16>
      %15 = vector.shape_cast %14 : vector<1x8x8x4xbf16> to vector<64x4xbf16>
      %c0_18 = arith.constant 0 : index
      %c4 = arith.constant 4 : index
      %16 = vector.load %arg5[%c0_18, %c4] : memref<64x36xbf16, #tpu.memory_space<vmem>>, vector<64x4xbf16>
      tpu.vector_store %arg5[%c0_18, %c4], %15 {strides = array<i32>} : memref<64x36xbf16, #tpu.memory_space<vmem>>, vector<64x4xbf16>,
      %c0_19 = arith.constant 0 : index
      %c0_20 = arith.constant 0 : index
      %c0_21 = arith.constant 0 : index
      %c1_22 = arith.constant 1 : index
      %c0_23 = arith.constant 0 : index
      %17 = vector.load %arg2[%c0_19, %c0_20, %c0_21, %c1_22, %c0_23] : memref<1x4x9x9x4xbf16, #tpu.memory_space<vmem>>, vector<1x1x8x8x4xbf16>
      %18 = vector.shape_cast %17 : vector<1x1x8x8x4xbf16> to vector<1x8x8x4xbf16>
      %19 = vector.shape_cast %18 : vector<1x8x8x4xbf16> to vector<64x4xbf16>
      %c0_24 = arith.constant 0 : index
      %c8 = arith.constant 8 : index
      %20 = vector.load %arg5[%c0_24, %c8] : memref<64x36xbf16, #tpu.memory_space<vmem>>, vector<64x4xbf16>
      tpu.vector_store %arg5[%c0_24, %c8], %19 {strides = array<i32>} : memref<64x36xbf16, #tpu.memory_space<vmem>>, vector<64x4xbf16>,
      %c0_25 = arith.constant 0 : index
      %c2 = arith.constant 2 : index
      %c0_26 = arith.constant 0 : index
      %c0_27 = arith.constant 0 : index
      %c0_28 = arith.constant 0 : index
      %21 = vector.load %arg2[%c0_25, %c2, %c0_26, %c0_27, %c0_28] : memref<1x4x9x9x4xbf16, #tpu.memory_space<vmem>>, vector<1x1x8x8x4xbf16>
      %22 = vector.shape_cast %21 : vector<1x1x8x8x4xbf16> to vector<1x8x8x4xbf16>
      %23 = vector.shape_cast %22 : vector<1x8x8x4xbf16> to vector<64x4xbf16>
      %c0_29 = arith.constant 0 : index
      %c12 = arith.constant 12 : index
      %24 = vector.load %arg5[%c0_29, %c12] : memref<64x36xbf16, #tpu.memory_space<vmem>>, vector<64x4xbf16>
      tpu.vector_store %arg5[%c0_29, %c12], %23 {strides = array<i32>} : memref<64x36xbf16, #tpu.memory_space<vmem>>, vector<64x4xbf16>,
      %c0_30 = arith.constant 0 : index
      %c3 = arith.constant 3 : index
      %c0_31 = arith.constant 0 : index
      %c0_32 = arith.constant 0 : index
      %c0_33 = arith.constant 0 : index
      %25 = vector.load %arg2[%c0_30, %c3, %c0_31, %c0_32, %c0_33] : memref<1x4x9x9x4xbf16, #tpu.memory_space<vmem>>, vector<1x1x8x8x4xbf16>
      %26 = vector.shape_cast %25 : vector<1x1x8x8x4xbf16> to vector<1x8x8x4xbf16>
      %27 = vector.shape_cast %26 : vector<1x8x8x4xbf16> to vector<64x4xbf16>
      %c0_34 = arith.constant 0 : index
      %c16 = arith.constant 16 : index
      %28 = vector.load %arg5[%c0_34, %c16] : memref<64x36xbf16, #tpu.memory_space<vmem>>, vector<64x4xbf16>
      tpu.vector_store %arg5[%c0_34, %c16], %27 {strides = array<i32>} : memref<64x36xbf16, #tpu.memory_space<vmem>>, vector<64x4xbf16>,
      %c0_35 = arith.constant 0 : index
      %c2_36 = arith.constant 2 : index
      %c0_37 = arith.constant 0 : index
      %c1_38 = arith.constant 1 : index
      %c0_39 = arith.constant 0 : index
      %29 = vector.load %arg2[%c0_35, %c2_36, %c0_37, %c1_38, %c0_39] : memref<1x4x9x9x4xbf16, #tpu.memory_space<vmem>>, vector<1x1x8x8x4xbf16>
      %30 = vector.shape_cast %29 : vector<1x1x8x8x4xbf16> to vector<1x8x8x4xbf16>
      %31 = vector.shape_cast %30 : vector<1x8x8x4xbf16> to vector<64x4xbf16>
      %c0_40 = arith.constant 0 : index
      %c20 = arith.constant 20 : index
      %32 = vector.load %arg5[%c0_40, %c20] : memref<64x36xbf16, #tpu.memory_space<vmem>>, vector<64x4xbf16>
      tpu.vector_store %arg5[%c0_40, %c20], %31 {strides = array<i32>} : memref<64x36xbf16, #tpu.memory_space<vmem>>, vector<64x4xbf16>,
      %c0_41 = arith.constant 0 : index
      %c0_42 = arith.constant 0 : index
      %c1_43 = arith.constant 1 : index
      %c0_44 = arith.constant 0 : index
      %c0_45 = arith.constant 0 : index
      %33 = vector.load %arg2[%c0_41, %c0_42, %c1_43, %c0_44, %c0_45] : memref<1x4x9x9x4xbf16, #tpu.memory_space<vmem>>, vector<1x1x8x8x4xbf16>
      %34 = vector.shape_cast %33 : vector<1x1x8x8x4xbf16> to vector<1x8x8x4xbf16>
      %35 = vector.shape_cast %34 : vector<1x8x8x4xbf16> to vector<64x4xbf16>
      %c0_46 = arith.constant 0 : index
      %c24 = arith.constant 24 : index
      %36 = vector.load %arg5[%c0_46, %c24] : memref<64x36xbf16, #tpu.memory_space<vmem>>, vector<64x4xbf16>
      tpu.vector_store %arg5[%c0_46, %c24], %35 {strides = array<i32>} : memref<64x36xbf16, #tpu.memory_space<vmem>>, vector<64x4xbf16>,
      %c0_47 = arith.constant 0 : index
      %c1_48 = arith.constant 1 : index
      %c1_49 = arith.constant 1 : index
      %c0_50 = arith.constant 0 : index
      %c0_51 = arith.constant 0 : index
      %37 = vector.load %arg2[%c0_47, %c1_48, %c1_49, %c0_50, %c0_51] : memref<1x4x9x9x4xbf16, #tpu.memory_space<vmem>>, vector<1x1x8x8x4xbf16>
      %38 = vector.shape_cast %37 : vector<1x1x8x8x4xbf16> to vector<1x8x8x4xbf16>
      %39 = vector.shape_cast %38 : vector<1x8x8x4xbf16> to vector<64x4xbf16>
      %c0_52 = arith.constant 0 : index
      %c28 = arith.constant 28 : index
      %40 = vector.load %arg5[%c0_52, %c28] : memref<64x36xbf16, #tpu.memory_space<vmem>>, vector<64x4xbf16>
      tpu.vector_store %arg5[%c0_52, %c28], %39 {strides = array<i32>} : memref<64x36xbf16, #tpu.memory_space<vmem>>, vector<64x4xbf16>,
      %c0_53 = arith.constant 0 : index
      %c0_54 = arith.constant 0 : index
      %c1_55 = arith.constant 1 : index
      %c1_56 = arith.constant 1 : index
      %c0_57 = arith.constant 0 : index
      %41 = vector.load %arg2[%c0_53, %c0_54, %c1_55, %c1_56, %c0_57] : memref<1x4x9x9x4xbf16, #tpu.memory_space<vmem>>, vector<1x1x8x8x4xbf16>
      %42 = vector.shape_cast %41 : vector<1x1x8x8x4xbf16> to vector<1x8x8x4xbf16>
      %43 = vector.shape_cast %42 : vector<1x8x8x4xbf16> to vector<64x4xbf16>
      %c0_58 = arith.constant 0 : index
      %c32 = arith.constant 32 : index
      %44 = vector.load %arg5[%c0_58, %c32] : memref<64x36xbf16, #tpu.memory_space<vmem>>, vector<64x4xbf16>
      tpu.vector_store %arg5[%c0_58, %c32], %43 {strides = array<i32>} : memref<64x36xbf16, #tpu.memory_space<vmem>>, vector<64x4xbf16>,
    } else {
    }
    %c0 = arith.constant 0 : index
    %c0_1 = arith.constant 0 : index
    %3 = vector.load %arg3[%c0, %c0_1] : memref<36x128xbf16, #tpu.memory_space<vmem>>, vector<36x128xbf16>
    %c0_2 = arith.constant 0 : index
    %c0_3 = arith.constant 0 : index
    %4 = vector.load %arg5[%c0_2, %c0_3] : memref<64x36xbf16, #tpu.memory_space<vmem>>, vector<64x36xbf16>
    %cst = arith.constant dense<0.000000e+00> : vector<64x128xf32>
    %5 = tpu.matmul %4, %3, %cst {dimension_numbers = #tpu.dot_dimension_numbers<[1], [0], [0], [1], [0, 0, 1, 1], [], []>} : vector<64x36xbf16>, vector<36x128xbf16>, vector<64x128xf32> -> vector<64x128xf32>
    %c0_4 = arith.constant 0 : index
    %c0_5 = arith.constant 0 : index
    %c0_6 = arith.constant 0 : index
    %6 = vector.load %arg4[%c0_4, %c0_5, %c0_6] : memref<1x64x128xf32, #tpu.memory_space<vmem>>, vector<1x64x128xf32>
    %7 = vector.shape_cast %6 : vector<1x64x128xf32> to vector<64x128xf32>
    %8 = vector.shape_cast %5 : vector<64x128xf32> to vector<1x64x128xf32>
    tpu.vector_store %arg4[%c0_4, %c0_5, %c0_6], %8 {strides = array<i32>} : memref<1x64x128xf32, #tpu.memory_space<vmem>>, vector<1x64x128xf32>,
    return
  }
  func.func @transform_0(%arg0: i32, %arg1: i32) -> (i32, i32, i32, i32, i32) {
    %c0_i32 = arith.constant 0 : i32
    %c0_i32_0 = arith.constant 0 : i32
    %c0_i32_1 = arith.constant 0 : i32
    %c0_i32_2 = arith.constant 0 : i32
    %c0_i32_3 = arith.constant 0 : i32
    return %arg0, %c0_i32, %c0_i32_0, %c0_i32_1, %c0_i32_2 : i32, i32, i32, i32, i32
  }
  func.func @transform_1(%arg0: i32, %arg1: i32) -> (i32, i32) {
    %c0_i32 = arith.constant 0 : i32
    %c0_i32_0 = arith.constant 0 : i32
    return %c0_i32, %arg1 : i32, i32
  }
  func.func @transform_2(%arg0: i32, %arg1: i32) -> (i32, i32, i32) {
    %c0_i32 = arith.constant 0 : i32
    %c0_i32_0 = arith.constant 0 : i32
    return %arg0, %c0_i32, %arg1 : i32, i32, i32
  }
}

</mosaic_0001>

<llo_original>
// kernel: tpu_custom_call.1
$region0: #{tpu_custom_call.1}
  #allocation0 [shape = 'u32[]', space=smem, size = 0x4, offset = 0x4, fixed_abs, tag = 'smem constant byte address 0x4 - core index']
  #allocation1 [shape = 'u32[144,128]{1,0:T(1,128)}', space=vmem, size = 0x12000, scoped, tag = 'internal scratch']
  #allocation2 [shape = 'bf16[64,36]{1,0:T(16,128)(2,1)}', space=vmem, size = 0x4000, scoped, tag = 'scratch operand']
  %s0 = inlined_call_operand.vmem [shape: bf16[2,4,9,9,4], index: 0, kind: input, shape index: {}]
  %s1 = inlined_call_operand.vmem [shape: bf16[36,128], index: 1, kind: input, shape index: {}]
  %s2 = inlined_call_operand.hbm [shape: f32[2,64,128], index: 2, kind: output, shape index: {}]
  %s3 = sld [smem:[#allocation0]]
  $region45: #{tpu_custom_call.1} parent=0
    _
  %s5 = ssub.s32 1, %s3
  %s6 = scalar_select 0, %s5, %s3
  $region1: #{tpu_custom_call.1} parent=0
    #allocation3 [shape = 'u8[65536]{0}', space=vmem, size = 0x10000, scoped, tag = 'output window, operand 0']
    #allocation4 [shape = 's32[2]{0}', space=sflag, size = 0x8, scoped, tag = 'scoped memory for tpu_custom_call.1']
    %7 = vsyncpa [#allocation4], 0
    %s8 = scalar_lea.sflag [#allocation4], 1
    %9 = vsyncpa %s8, 0
    loop: start=0, step=1, limit=4
    $region2: #{tpu_custom_call.1} parent=1 // loop_pre_header
      _
    $region3: #{tpu_custom_call.1} parent=1 // loop_header
      %s11 = sphi 0, %s15
      %p12 = scmp.ge.s32.totalorder %s11, 4
      %s18 = sphi 0, %s30
      %s19 = sphi 0, %s26
      %s20 = sphi 0, %s18
      %s21 = sphi 0, %s19
      %s22 = sphi 0, %s20
      %s23 = sphi 0, %s21
      %s33 = sphi 0, %s35
      %s36 = sphi 0, %s33
      %s37 = sphi 0, %s36
      %s53 = sphi 0, %s37
      %s59 = sphi 0, %s61
      %s62 = sphi 0, %s59
      %s63 = sphi 0, %s62
      %s79 = sphi 0, %s63
      %s87 = sphi 0, %s89
      %s90 = sphi 0, %s87
      %s91 = sphi 0, %s90
      %s107 = sphi 0, %s91
    $region4: #{tpu_custom_call.1} parent=1 // loop_header_branch
      %14 = sbr.rel (%p12) target = $region8
    $region5: #{tpu_custom_call.1} parent=1 // loop_body
      %s16 = ssub.s32 %s11, 1
      %s17 = ssub.s32 %s11, 2
      %s24 = sadd.s32 1, %s19
      %p25 = scmp.ge.s32.totalorder %s24, 1
      %s26 = scalar_select %p25, 0, %s24
      %s27 = sadd.s32 1, %s18
      %s28 = scalar_select %p25, %s27, %s18
      %p29 = scmp.ge.s32.totalorder %s28, 2
      %s30 = scalar_select %p29, 0, %s28
      %s31 = ssub.s32 %s18, %s30
      %p32 = scmp.eq.s32.totalorder %s31, 0
      %s34 = sadd.s32 %s33, 1
      %s35 = scalar_select %p32, %s33, %s34
      %p38 = pneg %p32
      %p39 = scmp.eq.s32.totalorder %s11, 1
      %p40 = por %p38, %p39
      %p41 = scmp.ne.s32.totalorder %s33, %s36
      %p42 = scmp.eq.s32.totalorder %s11, 0
      %p43 = por %p41, %p42
      %p44 = scmp.ne.s32.totalorder %s33, %s36
      %p45 = scmp.eq.s32.totalorder %s16, 1
      %p46 = por %p44, %p45
      %p47 = scmp.ne.s32.totalorder %s36, %s37
      %p48 = scmp.eq.s32.totalorder %s16, 0
      %p49 = por %p47, %p48
      %p50 = scmp.ne.s32.totalorder %s36, %s37
      %p51 = scmp.eq.s32.totalorder %s17, 1
      %p52 = por %p50, %p51
      %p54 = scmp.ne.s32.totalorder %s37, %s53
      %p55 = scmp.eq.s32.totalorder %s17, 0
      %p56 = por %p54, %p55
      %s57 = ssub.s32 %s19, %s26
      %p58 = scmp.eq.s32.totalorder %s57, 0
      %s60 = sadd.s32 %s59, 1
      %s61 = scalar_select %p58, %s59, %s60
      %p64 = pneg %p58
      %p65 = scmp.eq.s32.totalorder %s11, 1
      %p66 = por %p64, %p65
      %p67 = scmp.ne.s32.totalorder %s59, %s62
      %p68 = scmp.eq.s32.totalorder %s11, 0
      %p69 = por %p67, %p68
      %p70 = scmp.ne.s32.totalorder %s59, %s62
      %p71 = scmp.eq.s32.totalorder %s16, 1
      %p72 = por %p70, %p71
      %p73 = scmp.ne.s32.totalorder %s62, %s63
      %p74 = scmp.eq.s32.totalorder %s16, 0
      %p75 = por %p73, %p74
      %p76 = scmp.ne.s32.totalorder %s62, %s63
      %p77 = scmp.eq.s32.totalorder %s17, 1
      %p78 = por %p76, %p77
      %p80 = scmp.ne.s32.totalorder %s63, %s79
      %p81 = scmp.eq.s32.totalorder %s17, 0
      %p82 = por %p80, %p81
      %s83 = ssub.s32 %s18, %s30
      %s84 = ssub.s32 %s19, %s26
      %s85 = sor.u32 %s83, %s84
      %p86 = scmp.eq.s32.totalorder %s85, 0
      %s88 = sadd.s32 %s87, 1
      %s89 = scalar_select %p86, %s87, %s88
      %p92 = pneg %p86
      %p93 = scmp.eq.s32.totalorder %s11, 1
      %p94 = por %p92, %p93
      %p95 = scmp.ne.s32.totalorder %s87, %s90
      %p96 = scmp.eq.s32.totalorder %s11, 0
      %p97 = por %p95, %p96
      %p98 = scmp.ne.s32.totalorder %s87, %s90
      %p99 = scmp.eq.s32.totalorder %s16, 1
      %p100 = por %p98, %p99
      %p101 = scmp.ne.s32.totalorder %s90, %s91
      %p102 = scmp.eq.s32.totalorder %s16, 0
      %p103 = por %p101, %p102
      %p104 = scmp.ne.s32.totalorder %s90, %s91
      %p105 = scmp.eq.s32.totalorder %s17, 1
      %p106 = por %p104, %p105
      %p108 = scmp.ne.s32.totalorder %s91, %s107
      %p109 = scmp.eq.s32.totalorder %s17, 0
      %p110 = por %p108, %p109
      %p111 = scmp.le.s32.totalorder 1, %s11
      %p112 = scmp.lt.s32.totalorder %s11, 3
      %p113 = pnand %p111, %p112
      %p114 = pneg %p113
      // Predicated region
      $region9: #{tpu_custom_call.1} parent=5 // pred_check
        _
      $region10: #{tpu_custom_call.1} parent=5 // pred_check_branch
        %116 = sbr.rel (%p113) target = $region12
      $region11: #{tpu_custom_call.1} parent=5 // pred_region
        %s117 = ssub.s32 %s11, 1
        // Predicated region
        $region13: #{tpu_custom_call.1} parent=11 // pred_check
          %p118 = pneg %p75
        $region14: #{tpu_custom_call.1} parent=11 // pred_check_branch
          %120 = sbr.rel (%p118) target = $region16
        $region15: #{tpu_custom_call.1} parent=11 // pred_region
          %p121 = scmp.lt.s32.totalorder %s21, 0
          %s122 = scalar_select %p121, %s21, 0
          %s123 = smul.addr %s122, 4
          %s124 = scalar_lea.vmem %s1, %s123
        $region16: #{tpu_custom_call.1} parent=11 // pred_fallthru
          _
      $region12: #{tpu_custom_call.1} parent=5 // pred_fallthru
        _
      %p125 = scmp.lt.s32.totalorder %s11, 2
      // Predicated region
      $region17: #{tpu_custom_call.1} parent=5 // pred_check
        %p126 = pneg %p125
      $region18: #{tpu_custom_call.1} parent=5 // pred_check_branch
        %128 = sbr.rel (%p126) target = $region20
      $region19: #{tpu_custom_call.1} parent=5 // pred_region
        // Predicated region
        $region21: #{tpu_custom_call.1} parent=19 // pred_check
          %p129 = pneg %p43
        $region22: #{tpu_custom_call.1} parent=19 // pred_check_branch
          %131 = sbr.rel (%p129) target = $region24
        $region23: #{tpu_custom_call.1} parent=19 // pred_region
          %p132 = scmp.lt.s32.totalorder %s18, 1
          %s133 = scalar_select %p132, %s18, 1
          %s134 = smul.addr %s133, 72
          %s135 = smul.addr %s134, 4
          %s136 = scalar_lea.vmem %s0, %s135
        $region24: #{tpu_custom_call.1} parent=19 // pred_fallthru
          _
      $region20: #{tpu_custom_call.1} parent=5 // pred_fallthru
        _
      %p137 = scmp.le.s32.totalorder 1, %s11
      %p138 = scmp.lt.s32.totalorder %s11, 3
      %p139 = pnand %p137, %p138
      %p140 = pneg %p139
      // Predicated region
      $region25: #{tpu_custom_call.1} parent=5 // pred_check
        _
      $region26: #{tpu_custom_call.1} parent=5 // pred_check_branch
        %142 = sbr.rel (%p139) target = $region28
      $region27: #{tpu_custom_call.1} parent=5 // pred_region
        %s143 = ssub.s32 %s11, 1
        %p144 = scmp.lt.s32.totalorder %s20, 1
        %s145 = scalar_select %p144, %s20, 1
        %s146 = smul.addr %s145, 72
        %s147 = smul.addr %s146, 4
        %s148 = scalar_lea.vmem %s0, %s147
        %p149 = pneg %p49
        %p150 = pneg %p46
        %p151 = scmp.lt.s32.totalorder %s21, 0
        %s152 = scalar_select %p151, %s21, 0
        %s153 = smul.addr %s152, 4
        %s154 = scalar_lea.vmem %s1, %s153
        %p155 = pneg %p75
        %p156 = pneg %p72
        %p157 = pneg %p103
        %p158 = pneg %p100
        %s159 = sand.u32 %s90, 1
        %s160 = scalar_lea.sflag [#allocation4], %s159
        %s161 = sand.u32 %s90, 1
        %s162 = smul.addr %s161, 64
        %s163 = scalar_lea.vmem [#allocation3], %s162
        %p164 = scmp.lt.s32.totalorder %s20, 1
        %s165 = scalar_select %p164, %s20, 1
        %s166 = smul.addr %s165, 72
        %s167 = smul.addr %s166, 4
        %s168 = scalar_lea.vmem %s0, %s167
        %p169 = scmp.lt.s32.totalorder %s21, 0
        %s170 = scalar_select %p169, %s21, 0
        %s171 = smul.addr %s170, 4
        %s172 = scalar_lea.vmem %s1, %s171
        %p174 = scmp.eq.s32.totalorder %s21, 0
        // Predicated region
        $region29: #{tpu_custom_call.1} parent=27 // pred_check
          %p175 = pneg %p174
        $region30: #{tpu_custom_call.1} parent=27 // pred_check_branch
          %177 = sbr.rel (%p175) target = $region32
        $region31: #{tpu_custom_call.1} parent=27 // pred_region
          %v178 = vld [vmem:[%s168] sm:$0xf]
          %v179 = vld [vmem:[%s168 + $0x8] sm:$0xf]
          %v180 = vld [vmem:[%s168 + $0x10] sm:$0xf]
          %v181 = vld [vmem:[%s168 + $0x18] sm:$0xf]
          %v182 = vld [vmem:[%s168 + $0x20] sm:$0xf]
          %v183 = vld [vmem:[%s168 + $0x28] sm:$0xf]
          %v184 = vld [vmem:[%s168 + $0x30] sm:$0xf]
          %v185 = vld [vmem:[%s168 + $0x38] sm:$0xf]
          %v194 = vunpack.c.l.b16 %v178
          %v195 = vunpack.c.l.b16 %v179
          %v196 = vunpack.c.l.b16 %v180
          %v197 = vunpack.c.l.b16 %v181
          %v198 = vunpack.c.l.b16 %v182
          %v199 = vunpack.c.l.b16 %v183
          %v200 = vunpack.c.l.b16 %v184
          %v201 = vunpack.c.l.b16 %v185
          %v202 = vpack.c.b16 %v195, %v194
          %v203 = vpack.c.b16 %v197, %v196
          %v204 = vpack.c.b16 %v199, %v198
          %v205 = vpack.c.b16 %v201, %v200
          %vm210 = vcmask 31744
          %211 = vst.msk [vmem:[#allocation2] sm:$0xff] %vm210, %v202
          %212 = vst.msk [vmem:[#allocation2 + $0x8] sm:$0xff] %vm210, %v203
          %213 = vst.msk [vmem:[#allocation2 + $0x10] sm:$0xff] %vm210, %v204
          %214 = vst.msk [vmem:[#allocation2 + $0x18] sm:$0xff] %vm210, %v205
          %s215 = scalar_lea.vmem %s168, 72
          %v216 = vld [vmem:[%s215] sm:$0xf]
          %v217 = vld [vmem:[%s215 + $0x8] sm:$0xf]
          %v218 = vld [vmem:[%s215 + $0x10] sm:$0xf]
          %v219 = vld [vmem:[%s215 + $0x18] sm:$0xf]
          %v220 = vld [vmem:[%s215 + $0x20] sm:$0xf]
          %v221 = vld [vmem:[%s215 + $0x28] sm:$0xf]
          %v222 = vld [vmem:[%s215 + $0x30] sm:$0xf]
          %v223 = vld [vmem:[%s215 + $0x38] sm:$0xf]
          %v232 = vunpack.c.l.b16 %v216
          %v233 = vunpack.c.l.b16 %v217
          %v234 = vunpack.c.l.b16 %v218
          %v235 = vunpack.c.l.b16 %v219
          %v236 = vunpack.c.l.b16 %v220
          %v237 = vunpack.c.l.b16 %v221
          %v238 = vunpack.c.l.b16 %v222
          %v239 = vunpack.c.l.b16 %v223
          %v240 = vpack.c.b16 %v233, %v232
          %v241 = vpack.c.b16 %v235, %v234
          %v242 = vpack.c.b16 %v237, %v236
          %v243 = vpack.c.b16 %v239, %v238
          %244 = vrot.lane.b32.xlu0 %v240, 4
          %v245 = vpop.permute.xlu0 %244
          %246 = vrot.lane.b32.xlu0 %v241, 4
          %v247 = vpop.permute.xlu0 %246
          %248 = vrot.lane.b32.xlu0 %v242, 4
          %v249 = vpop.permute.xlu0 %248
          %250 = vrot.lane.b32.xlu0 %v243, 4
          %v251 = vpop.permute.xlu0 %250
          %vm256 = vcmask 64544
          %257 = vst.msk [vmem:[#allocation2] sm:$0xff] %vm256, %v245
          %258 = vst.msk [vmem:[#allocation2 + $0x8] sm:$0xff] %vm256, %v247
          %259 = vst.msk [vmem:[#allocation2 + $0x10] sm:$0xff] %vm256, %v249
          %260 = vst.msk [vmem:[#allocation2 + $0x18] sm:$0xff] %vm256, %v251
          %v261 = vld [vmem:[%s168] sm:$0xf]
          %v262 = vld [vmem:[%s168 + $0x4] sm:$0x1]
          %v263 = vld [vmem:[%s168 + $0x8] sm:$0xf]
          %v264 = vld [vmem:[%s168 + $0xc] sm:$0x1]
          %v265 = vld [vmem:[%s168 + $0x10] sm:$0xf]
          %v266 = vld [vmem:[%s168 + $0x14] sm:$0x1]
          %v267 = vld [vmem:[%s168 + $0x18] sm:$0xf]
          %v268 = vld [vmem:[%s168 + $0x1c] sm:$0x1]
          %v269 = vld [vmem:[%s168 + $0x20] sm:$0xf]
          %v270 = vld [vmem:[%s168 + $0x24] sm:$0x1]
          %v271 = vld [vmem:[%s168 + $0x28] sm:$0xf]
          %v272 = vld [vmem:[%s168 + $0x2c] sm:$0x1]
          %v273 = vld [vmem:[%s168 + $0x30] sm:$0xf]
          %v274 = vld [vmem:[%s168 + $0x34] sm:$0x1]
          %v275 = vld [vmem:[%s168 + $0x38] sm:$0xf]
          %v276 = vld [vmem:[%s168 + $0x3c] sm:$0x1]
          %vm277 = vsmask.f32 3328
          %vm278 = vsmask.f32 7440
          %vm279 = vmor %vm277, %vm278
          %v281 = vshrl.u32 %v261, 16
          %v283 = vrot.slane %v281, 4
          %v284 = vshll.u32 %v261, 16
          %v286 = vrot.slane %v284, 5
          %v287 = vor.u32 %v283, %v286
          %v288 = vrot.slane %v287, 4
          %v290 = vshll.u32 %v262, 16
          %v292 = vrot.slane %v290, 5
          %v293 = vsel %vm279, %v288, %v292
          %v295 = vshrl.u32 %v263, 16
          %v297 = vrot.slane %v295, 4
          %v298 = vshll.u32 %v263, 16
          %v300 = vrot.slane %v298, 5
          %v301 = vor.u32 %v297, %v300
          %v302 = vrot.slane %v301, 4
          %v304 = vshll.u32 %v264, 16
          %v306 = vrot.slane %v304, 5
          %v307 = vsel %vm279, %v302, %v306
          %v309 = vshrl.u32 %v265, 16
          %v311 = vrot.slane %v309, 4
          %v312 = vshll.u32 %v265, 16
          %v314 = vrot.slane %v312, 5
          %v315 = vor.u32 %v311, %v314
          %v316 = vrot.slane %v315, 4
          %v318 = vshll.u32 %v266, 16
          %v320 = vrot.slane %v318, 5
          %v321 = vsel %vm279, %v316, %v320
          %v323 = vshrl.u32 %v267, 16
          %v325 = vrot.slane %v323, 4
          %v326 = vshll.u32 %v267, 16
          %v328 = vrot.slane %v326, 5
          %v329 = vor.u32 %v325, %v328
          %v330 = vrot.slane %v329, 4
          %v332 = vshll.u32 %v268, 16
          %v334 = vrot.slane %v332, 5
          %v335 = vsel %vm279, %v330, %v334
          %v337 = vshrl.u32 %v269, 16
          %v339 = vrot.slane %v337, 4
          %v340 = vshll.u32 %v269, 16
          %v342 = vrot.slane %v340, 5
          %v343 = vor.u32 %v339, %v342
          %v344 = vrot.slane %v343, 4
          %v346 = vshll.u32 %v270, 16
          %v348 = vrot.slane %v346, 5
          %v349 = vsel %vm279, %v344, %v348
          %v351 = vshrl.u32 %v271, 16
          %v353 = vrot.slane %v351, 4
          %v354 = vshll.u32 %v271, 16
          %v356 = vrot.slane %v354, 5
          %v357 = vor.u32 %v353, %v356
          %v358 = vrot.slane %v357, 4
          %v360 = vshll.u32 %v272, 16
          %v362 = vrot.slane %v360, 5
          %v363 = vsel %vm279, %v358, %v362
          %v365 = vshrl.u32 %v273, 16
          %v367 = vrot.slane %v365, 4
          %v368 = vshll.u32 %v273, 16
          %v370 = vrot.slane %v368, 5
          %v371 = vor.u32 %v367, %v370
          %v372 = vrot.slane %v371, 4
          %v374 = vshll.u32 %v274, 16
          %v376 = vrot.slane %v374, 5
          %v377 = vsel %vm279, %v372, %v376
          %v379 = vshrl.u32 %v275, 16
          %v381 = vrot.slane %v379, 4
          %v382 = vshll.u32 %v275, 16
          %v384 = vrot.slane %v382, 5
          %v385 = vor.u32 %v381, %v384
          %v386 = vrot.slane %v385, 4
          %v388 = vshll.u32 %v276, 16
          %v390 = vrot.slane %v388, 5
          %v391 = vsel %vm279, %v386, %v390
          %v392 = vunpack.c.l.b16 %v293
          %v393 = vunpack.c.l.b16 %v307
          %v394 = vunpack.c.l.b16 %v321
          %v395 = vunpack.c.l.b16 %v335
          %v396 = vunpack.c.l.b16 %v349
          %v397 = vunpack.c.l.b16 %v363
          %v398 = vunpack.c.l.b16 %v377
          %v399 = vunpack.c.l.b16 %v391
          %v400 = vpack.c.b16 %v393, %v392
          %v401 = vpack.c.b16 %v395, %v394
          %v402 = vpack.c.b16 %v397, %v396
          %v403 = vpack.c.b16 %v399, %v398
          %404 = vrot.lane.b32.xlu0 %v400, 8
          %v405 = vpop.permute.xlu0 %404
          %406 = vrot.lane.b32.xlu0 %v401, 8
          %v407 = vpop.permute.xlu0 %406
          %408 = vrot.lane.b32.xlu0 %v402, 8
          %v409 = vpop.permute.xlu0 %408
          %410 = vrot.lane.b32.xlu0 %v403, 8
          %v411 = vpop.permute.xlu0 %410
          %vm416 = vcmask 97344
          %417 = vst.msk [vmem:[#allocation2] sm:$0xff] %vm416, %v405
          %418 = vst.msk [vmem:[#allocation2 + $0x8] sm:$0xff] %vm416, %v407
          %419 = vst.msk [vmem:[#allocation2 + $0x10] sm:$0xff] %vm416, %v409
          %420 = vst.msk [vmem:[#allocation2 + $0x18] sm:$0xff] %vm416, %v411
          %s421 = scalar_lea.vmem %s168, 144
          %v422 = vld [vmem:[%s421] sm:$0xf]
          %v423 = vld [vmem:[%s421 + $0x8] sm:$0xf]
          %v424 = vld [vmem:[%s421 + $0x10] sm:$0xf]
          %v425 = vld [vmem:[%s421 + $0x18] sm:$0xf]
          %v426 = vld [vmem:[%s421 + $0x20] sm:$0xf]
          %v427 = vld [vmem:[%s421 + $0x28] sm:$0xf]
          %v428 = vld [vmem:[%s421 + $0x30] sm:$0xf]
          %v429 = vld [vmem:[%s421 + $0x38] sm:$0xf]
          %v438 = vunpack.c.l.b16 %v422
          %v439 = vunpack.c.l.b16 %v423
          %v440 = vunpack.c.l.b16 %v424
          %v441 = vunpack.c.l.b16 %v425
          %v442 = vunpack.c.l.b16 %v426
          %v443 = vunpack.c.l.b16 %v427
          %v444 = vunpack.c.l.b16 %v428
          %v445 = vunpack.c.l.b16 %v429
          %v446 = vpack.c.b16 %v439, %v438
          %v447 = vpack.c.b16 %v441, %v440
          %v448 = vpack.c.b16 %v443, %v442
          %v449 = vpack.c.b16 %v445, %v444
          %450 = vrot.lane.b32.xlu0 %v446, 12
          %v451 = vpop.permute.xlu0 %450
          %452 = vrot.lane.b32.xlu0 %v447, 12
          %v453 = vpop.permute.xlu0 %452
          %454 = vrot.lane.b32.xlu0 %v448, 12
          %v455 = vpop.permute.xlu0 %454
          %456 = vrot.lane.b32.xlu0 %v449, 12
          %v457 = vpop.permute.xlu0 %456
          %vm462 = vcmask 130144
          %463 = vst.msk [vmem:[#allocation2] sm:$0xff] %vm462, %v451
          %464 = vst.msk [vmem:[#allocation2 + $0x8] sm:$0xff] %vm462, %v453
          %465 = vst.msk [vmem:[#allocation2 + $0x10] sm:$0xff] %vm462, %v455
          %466 = vst.msk [vmem:[#allocation2 + $0x18] sm:$0xff] %vm462, %v457
          %s467 = scalar_lea.vmem %s168, 216
          %v468 = vld [vmem:[%s467] sm:$0xf]
          %v469 = vld [vmem:[%s467 + $0x8] sm:$0xf]
          %v470 = vld [vmem:[%s467 + $0x10] sm:$0xf]
          %v471 = vld [vmem:[%s467 + $0x18] sm:$0xf]
          %v472 = vld [vmem:[%s467 + $0x20] sm:$0xf]
          %v473 = vld [vmem:[%s467 + $0x28] sm:$0xf]
          %v474 = vld [vmem:[%s467 + $0x30] sm:$0xf]
          %v475 = vld [vmem:[%s467 + $0x38] sm:$0xf]
          %v484 = vunpack.c.l.b16 %v468
          %v485 = vunpack.c.l.b16 %v469
          %v486 = vunpack.c.l.b16 %v470
          %v487 = vunpack.c.l.b16 %v471
          %v488 = vunpack.c.l.b16 %v472
          %v489 = vunpack.c.l.b16 %v473
          %v490 = vunpack.c.l.b16 %v474
          %v491 = vunpack.c.l.b16 %v475
          %v492 = vpack.c.b16 %v485, %v484
          %v493 = vpack.c.b16 %v487, %v486
          %v494 = vpack.c.b16 %v489, %v488
          %v495 = vpack.c.b16 %v491, %v490
          %496 = vrot.lane.b32.xlu0 %v492, 16
          %v497 = vpop.permute.xlu0 %496
          %498 = vrot.lane.b32.xlu0 %v493, 16
          %v499 = vpop.permute.xlu0 %498
          %500 = vrot.lane.b32.xlu0 %v494, 16
          %v501 = vpop.permute.xlu0 %500
          %502 = vrot.lane.b32.xlu0 %v495, 16
          %v503 = vpop.permute.xlu0 %502
          %vm508 = vcmask 162944
          %509 = vst.msk [vmem:[#allocation2] sm:$0xff] %vm508, %v497
          %510 = vst.msk [vmem:[#allocation2 + $0x8] sm:$0xff] %vm508, %v499
          %511 = vst.msk [vmem:[#allocation2 + $0x10] sm:$0xff] %vm508, %v501
          %512 = vst.msk [vmem:[#allocation2 + $0x18] sm:$0xff] %vm508, %v503
          %v513 = vld [vmem:[%s421] sm:$0xf]
          %v514 = vld [vmem:[%s421 + $0x4] sm:$0x1]
          %v515 = vld [vmem:[%s421 + $0x8] sm:$0xf]
          %v516 = vld [vmem:[%s421 + $0xc] sm:$0x1]
          %v517 = vld [vmem:[%s421 + $0x10] sm:$0xf]
          %v518 = vld [vmem:[%s421 + $0x14] sm:$0x1]
          %v519 = vld [vmem:[%s421 + $0x18] sm:$0xf]
          %v520 = vld [vmem:[%s421 + $0x1c] sm:$0x1]
          %v521 = vld [vmem:[%s421 + $0x20] sm:$0xf]
          %v522 = vld [vmem:[%s421 + $0x24] sm:$0x1]
          %v523 = vld [vmem:[%s421 + $0x28] sm:$0xf]
          %v524 = vld [vmem:[%s421 + $0x2c] sm:$0x1]
          %v525 = vld [vmem:[%s421 + $0x30] sm:$0xf]
          %v526 = vld [vmem:[%s421 + $0x34] sm:$0x1]
          %v527 = vld [vmem:[%s421 + $0x38] sm:$0xf]
          %v528 = vld [vmem:[%s421 + $0x3c] sm:$0x1]
          %v530 = vshrl.u32 %v513, 16
          %v532 = vrot.slane %v530, 4
          %v533 = vshll.u32 %v513, 16
          %v535 = vrot.slane %v533, 5
          %v536 = vor.u32 %v532, %v535
          %v537 = vrot.slane %v536, 4
          %v539 = vshll.u32 %v514, 16
          %v541 = vrot.slane %v539, 5
          %v542 = vsel %vm279, %v537, %v541
          %v544 = vshrl.u32 %v515, 16
          %v546 = vrot.slane %v544, 4
          %v547 = vshll.u32 %v515, 16
          %v549 = vrot.slane %v547, 5
          %v550 = vor.u32 %v546, %v549
          %v551 = vrot.slane %v550, 4
          %v553 = vshll.u32 %v516, 16
          %v555 = vrot.slane %v553, 5
          %v556 = vsel %vm279, %v551, %v555
          %v558 = vshrl.u32 %v517, 16
          %v560 = vrot.slane %v558, 4
          %v561 = vshll.u32 %v517, 16
          %v563 = vrot.slane %v561, 5
          %v564 = vor.u32 %v560, %v563
          %v565 = vrot.slane %v564, 4
          %v567 = vshll.u32 %v518, 16
          %v569 = vrot.slane %v567, 5
          %v570 = vsel %vm279, %v565, %v569
          %v572 = vshrl.u32 %v519, 16
          %v574 = vrot.slane %v572, 4
          %v575 = vshll.u32 %v519, 16
          %v577 = vrot.slane %v575, 5
          %v578 = vor.u32 %v574, %v577
          %v579 = vrot.slane %v578, 4
          %v581 = vshll.u32 %v520, 16
          %v583 = vrot.slane %v581, 5
          %v584 = vsel %vm279, %v579, %v583
          %v586 = vshrl.u32 %v521, 16
          %v588 = vrot.slane %v586, 4
          %v589 = vshll.u32 %v521, 16
          %v591 = vrot.slane %v589, 5
          %v592 = vor.u32 %v588, %v591
          %v593 = vrot.slane %v592, 4
          %v595 = vshll.u32 %v522, 16
          %v597 = vrot.slane %v595, 5
          %v598 = vsel %vm279, %v593, %v597
          %v600 = vshrl.u32 %v523, 16
          %v602 = vrot.slane %v600, 4
          %v603 = vshll.u32 %v523, 16
          %v605 = vrot.slane %v603, 5
          %v606 = vor.u32 %v602, %v605
          %v607 = vrot.slane %v606, 4
          %v609 = vshll.u32 %v524, 16
          %v611 = vrot.slane %v609, 5
          %v612 = vsel %vm279, %v607, %v611
          %v614 = vshrl.u32 %v525, 16
          %v616 = vrot.slane %v614, 4
          %v617 = vshll.u32 %v525, 16
          %v619 = vrot.slane %v617, 5
          %v620 = vor.u32 %v616, %v619
          %v621 = vrot.slane %v620, 4
          %v623 = vshll.u32 %v526, 16
          %v625 = vrot.slane %v623, 5
          %v626 = vsel %vm279, %v621, %v625
          %v628 = vshrl.u32 %v527, 16
          %v630 = vrot.slane %v628, 4
          %v631 = vshll.u32 %v527, 16
          %v633 = vrot.slane %v631, 5
          %v634 = vor.u32 %v630, %v633
          %v635 = vrot.slane %v634, 4
          %v637 = vshll.u32 %v528, 16
          %v639 = vrot.slane %v637, 5
          %v640 = vsel %vm279, %v635, %v639
          %v641 = vunpack.c.l.b16 %v542
          %v642 = vunpack.c.l.b16 %v556
          %v643 = vunpack.c.l.b16 %v570
          %v644 = vunpack.c.l.b16 %v584
          %v645 = vunpack.c.l.b16 %v598
          %v646 = vunpack.c.l.b16 %v612
          %v647 = vunpack.c.l.b16 %v626
          %v648 = vunpack.c.l.b16 %v640
          %v649 = vpack.c.b16 %v642, %v641
          %v650 = vpack.c.b16 %v644, %v643
          %v651 = vpack.c.b16 %v646, %v645
          %v652 = vpack.c.b16 %v648, %v647
          %653 = vrot.lane.b32.xlu0 %v649, 20
          %v654 = vpop.permute.xlu0 %653
          %655 = vrot.lane.b32.xlu0 %v650, 20
          %v656 = vpop.permute.xlu0 %655
          %657 = vrot.lane.b32.xlu0 %v651, 20
          %v658 = vpop.permute.xlu0 %657
          %659 = vrot.lane.b32.xlu0 %v652, 20
          %v660 = vpop.permute.xlu0 %659
          %vm665 = vcmask 195744
          %666 = vst.msk [vmem:[#allocation2] sm:$0xff] %vm665, %v654
          %667 = vst.msk [vmem:[#allocation2 + $0x8] sm:$0xff] %vm665, %v656
          %668 = vst.msk [vmem:[#allocation2 + $0x10] sm:$0xff] %vm665, %v658
          %669 = vst.msk [vmem:[#allocation2 + $0x18] sm:$0xff] %vm665, %v660
          %s670 = scalar_lea.vmem %s168, 8
          %v671 = vld [vmem:[%s670] sm:$0xf]
          %v672 = vld [vmem:[%s670 + $0x8] sm:$0xf]
          %v673 = vld [vmem:[%s670 + $0x10] sm:$0xf]
          %v674 = vld [vmem:[%s670 + $0x18] sm:$0xf]
          %v675 = vld [vmem:[%s670 + $0x20] sm:$0xf]
          %v676 = vld [vmem:[%s670 + $0x28] sm:$0xf]
          %v677 = vld [vmem:[%s670 + $0x30] sm:$0xf]
          %v678 = vld [vmem:[%s670 + $0x38] sm:$0xf]
          %v687 = vunpack.c.l.b16 %v671
          %v688 = vunpack.c.l.b16 %v672
          %v689 = vunpack.c.l.b16 %v673
          %v690 = vunpack.c.l.b16 %v674
          %v691 = vunpack.c.l.b16 %v675
          %v692 = vunpack.c.l.b16 %v676
          %v693 = vunpack.c.l.b16 %v677
          %v694 = vunpack.c.l.b16 %v678
          %v695 = vpack.c.b16 %v688, %v687
          %v696 = vpack.c.b16 %v690, %v689
          %v697 = vpack.c.b16 %v692, %v691
          %v698 = vpack.c.b16 %v694, %v693
          %699 = vrot.lane.b32.xlu0 %v695, 24
          %v700 = vpop.permute.xlu0 %699
          %701 = vrot.lane.b32.xlu0 %v696, 24
          %v702 = vpop.permute.xlu0 %701
          %703 = vrot.lane.b32.xlu0 %v697, 24
          %v704 = vpop.permute.xlu0 %703
          %705 = vrot.lane.b32.xlu0 %v698, 24
          %v706 = vpop.permute.xlu0 %705
          %vm711 = vcmask 228544
          %712 = vst.msk [vmem:[#allocation2] sm:$0xff] %vm711, %v700
          %713 = vst.msk [vmem:[#allocation2 + $0x8] sm:$0xff] %vm711, %v702
          %714 = vst.msk [vmem:[#allocation2 + $0x10] sm:$0xff] %vm711, %v704
          %715 = vst.msk [vmem:[#allocation2 + $0x18] sm:$0xff] %vm711, %v706
          %s716 = scalar_lea.vmem %s168, 80
          %v717 = vld [vmem:[%s716] sm:$0xf]
          %v718 = vld [vmem:[%s716 + $0x8] sm:$0xf]
          %v719 = vld [vmem:[%s716 + $0x10] sm:$0xf]
          %v720 = vld [vmem:[%s716 + $0x18] sm:$0xf]
          %v721 = vld [vmem:[%s716 + $0x20] sm:$0xf]
          %v722 = vld [vmem:[%s716 + $0x28] sm:$0xf]
          %v723 = vld [vmem:[%s716 + $0x30] sm:$0xf]
          %v724 = vld [vmem:[%s716 + $0x38] sm:$0xf]
          %v733 = vunpack.c.l.b16 %v717
          %v734 = vunpack.c.l.b16 %v718
          %v735 = vunpack.c.l.b16 %v719
          %v736 = vunpack.c.l.b16 %v720
          %v737 = vunpack.c.l.b16 %v721
          %v738 = vunpack.c.l.b16 %v722
          %v739 = vunpack.c.l.b16 %v723
          %v740 = vunpack.c.l.b16 %v724
          %v741 = vpack.c.b16 %v734, %v733
          %v742 = vpack.c.b16 %v736, %v735
          %v743 = vpack.c.b16 %v738, %v737
          %v744 = vpack.c.b16 %v740, %v739
          %745 = vrot.lane.b32.xlu0 %v741, 28
          %v746 = vpop.permute.xlu0 %745
          %747 = vrot.lane.b32.xlu0 %v742, 28
          %v748 = vpop.permute.xlu0 %747
          %749 = vrot.lane.b32.xlu0 %v743, 28
          %v750 = vpop.permute.xlu0 %749
          %751 = vrot.lane.b32.xlu0 %v744, 28
          %v752 = vpop.permute.xlu0 %751
          %vm757 = vcmask 261344
          %758 = vst.msk [vmem:[#allocation2] sm:$0xff] %vm757, %v746
          %759 = vst.msk [vmem:[#allocation2 + $0x8] sm:$0xff] %vm757, %v748
          %760 = vst.msk [vmem:[#allocation2 + $0x10] sm:$0xff] %vm757, %v750
          %761 = vst.msk [vmem:[#allocation2 + $0x18] sm:$0xff] %vm757, %v752
          %v762 = vld [vmem:[%s670] sm:$0xf]
          %v763 = vld [vmem:[%s670 + $0x4] sm:$0x1]
          %v764 = vld [vmem:[%s670 + $0x8] sm:$0xf]
          %v765 = vld [vmem:[%s670 + $0xc] sm:$0x1]
          %v766 = vld [vmem:[%s670 + $0x10] sm:$0xf]
          %v767 = vld [vmem:[%s670 + $0x14] sm:$0x1]
          %v768 = vld [vmem:[%s670 + $0x18] sm:$0xf]
          %v769 = vld [vmem:[%s670 + $0x1c] sm:$0x1]
          %v770 = vld [vmem:[%s670 + $0x20] sm:$0xf]
          %v771 = vld [vmem:[%s670 + $0x24] sm:$0x1]
          %v772 = vld [vmem:[%s670 + $0x28] sm:$0xf]
          %v773 = vld [vmem:[%s670 + $0x2c] sm:$0x1]
          %v774 = vld [vmem:[%s670 + $0x30] sm:$0xf]
          %v775 = vld [vmem:[%s670 + $0x34] sm:$0x1]
          %v776 = vld [vmem:[%s670 + $0x38] sm:$0xf]
          %v777 = vld [vmem:[%s670 + $0x3c] sm:$0x1]
          %v779 = vshrl.u32 %v762, 16
          %v781 = vrot.slane %v779, 4
          %v782 = vshll.u32 %v762, 16
          %v784 = vrot.slane %v782, 5
          %v785 = vor.u32 %v781, %v784
          %v786 = vrot.slane %v785, 4
          %v788 = vshll.u32 %v763, 16
          %v790 = vrot.slane %v788, 5
          %v791 = vsel %vm279, %v786, %v790
          %v793 = vshrl.u32 %v764, 16
          %v795 = vrot.slane %v793, 4
          %v796 = vshll.u32 %v764, 16
          %v798 = vrot.slane %v796, 5
          %v799 = vor.u32 %v795, %v798
          %v800 = vrot.slane %v799, 4
          %v802 = vshll.u32 %v765, 16
          %v804 = vrot.slane %v802, 5
          %v805 = vsel %vm279, %v800, %v804
          %v807 = vshrl.u32 %v766, 16
          %v809 = vrot.slane %v807, 4
          %v810 = vshll.u32 %v766, 16
          %v812 = vrot.slane %v810, 5
          %v813 = vor.u32 %v809, %v812
          %v814 = vrot.slane %v813, 4
          %v816 = vshll.u32 %v767, 16
          %v818 = vrot.slane %v816, 5
          %v819 = vsel %vm279, %v814, %v818
          %v821 = vshrl.u32 %v768, 16
          %v823 = vrot.slane %v821, 4
          %v824 = vshll.u32 %v768, 16
          %v826 = vrot.slane %v824, 5
          %v827 = vor.u32 %v823, %v826
          %v828 = vrot.slane %v827, 4
          %v830 = vshll.u32 %v769, 16
          %v832 = vrot.slane %v830, 5
          %v833 = vsel %vm279, %v828, %v832
          %v835 = vshrl.u32 %v770, 16
          %v837 = vrot.slane %v835, 4
          %v838 = vshll.u32 %v770, 16
          %v840 = vrot.slane %v838, 5
          %v841 = vor.u32 %v837, %v840
          %v842 = vrot.slane %v841, 4
          %v844 = vshll.u32 %v771, 16
          %v846 = vrot.slane %v844, 5
          %v847 = vsel %vm279, %v842, %v846
          %v849 = vshrl.u32 %v772, 16
          %v851 = vrot.slane %v849, 4
          %v852 = vshll.u32 %v772, 16
          %v854 = vrot.slane %v852, 5
          %v855 = vor.u32 %v851, %v854
          %v856 = vrot.slane %v855, 4
          %v858 = vshll.u32 %v773, 16
          %v860 = vrot.slane %v858, 5
          %v861 = vsel %vm279, %v856, %v860
          %v863 = vshrl.u32 %v774, 16
          %v865 = vrot.slane %v863, 4
          %v866 = vshll.u32 %v774, 16
          %v868 = vrot.slane %v866, 5
          %v869 = vor.u32 %v865, %v868
          %v870 = vrot.slane %v869, 4
          %v872 = vshll.u32 %v775, 16
          %v874 = vrot.slane %v872, 5
          %v875 = vsel %vm279, %v870, %v874
          %v877 = vshrl.u32 %v776, 16
          %v879 = vrot.slane %v877, 4
          %v880 = vshll.u32 %v776, 16
          %v882 = vrot.slane %v880, 5
          %v883 = vor.u32 %v879, %v882
          %v884 = vrot.slane %v883, 4
          %v886 = vshll.u32 %v777, 16
          %v888 = vrot.slane %v886, 5
          %v889 = vsel %vm279, %v884, %v888
          %v890 = vunpack.c.l.b16 %v791
          %v891 = vunpack.c.l.b16 %v805
          %v892 = vunpack.c.l.b16 %v819
          %v893 = vunpack.c.l.b16 %v833
          %v894 = vunpack.c.l.b16 %v847
          %v895 = vunpack.c.l.b16 %v861
          %v896 = vunpack.c.l.b16 %v875
          %v897 = vunpack.c.l.b16 %v889
          %v898 = vpack.c.b16 %v891, %v890
          %v899 = vpack.c.b16 %v893, %v892
          %v900 = vpack.c.b16 %v895, %v894
          %v901 = vpack.c.b16 %v897, %v896
          %902 = vrot.lane.b32.xlu0 %v898, 32
          %v903 = vpop.permute.xlu0 %902
          %904 = vrot.lane.b32.xlu0 %v899, 32
          %v905 = vpop.permute.xlu0 %904
          %906 = vrot.lane.b32.xlu0 %v900, 32
          %v907 = vpop.permute.xlu0 %906
          %908 = vrot.lane.b32.xlu0 %v901, 32
          %v909 = vpop.permute.xlu0 %908
          %vm914 = vcmask 294144
          %915 = vst.msk [vmem:[#allocation2] sm:$0xff] %vm914, %v903
          %916 = vst.msk [vmem:[#allocation2 + $0x8] sm:$0xff] %vm914, %v905
          %917 = vst.msk [vmem:[#allocation2 + $0x10] sm:$0xff] %vm914, %v907
          %918 = vst.msk [vmem:[#allocation2 + $0x18] sm:$0xff] %vm914, %v909
        $region32: #{tpu_custom_call.1} parent=27 // pred_fallthru
          _
        %v919 = vld [vmem:[%s172] sm:$0xf]
        %v920 = vld [vmem:[%s172 + $0x4] sm:$0xf]
        %v921 = vld [vmem:[%s172 + $0x8] sm:$0xf]
        %v922 = vld [vmem:[%s172 + $0xc] sm:$0xf]
        %v923 = vld [vmem:[%s172 + $0x10] sm:$0x3]
        %v924 = vld [vmem:[#allocation2] sm:$0xff]
        %v925 = vld [vmem:[#allocation2 + $0x8] sm:$0xff]
        %v926 = vld [vmem:[#allocation2 + $0x10] sm:$0xff]
        %v927 = vld [vmem:[#allocation2 + $0x18] sm:$0xff]
        %v933 = vunpack.c.l.b16 %v919
        %v934 = vunpack.c.l.b16 %v920
        %v935 = vunpack.c.l.b16 %v921
        %v936 = vunpack.c.l.b16 %v922
        %v937 = vunpack.c.l.b16 %v923
        %v938 = vpack.c.b16 %v934, %v933
        %v939 = vpack.c.b16 %v936, %v935
        %v940 = vpack.c.b16 %v937, %v937
        %vm943 = vcmask 293888
        %v945 = vsel %vm943, %v924, 0
        %v948 = vsel %vm943, %v925, 0
        %v951 = vsel %vm943, %v926, 0
        %v954 = vsel %vm943, %v927, 0
        %vm956 = vcmask 1041408
        %v958 = vsel %vm956, %v940, 0
        %960 = vmatprep.subr.bf16.mxu0 0
        %961 = vmatpush1.bf16.msra.mxu0 %v938
        %962 = vmatprep.subr.bf16.mxu0 0
        %963 = vmatpush1.bf16.msra.mxu0 %v939
        %964 = vmatprep.subr.bf16.mxu0 0
        %965 = vmatpush1.bf16.msra.mxu0 %v958
        %966 = vmatprep.subr.bf16.mxu0 0
        %967 = vmatpush1.bf16.msra.mxu0 0
        %968 = vmatprep.subr.bf16.mxu0 0
        %969 = vmatpush1.bf16.msra.mxu0 0
        %970 = vmatprep.subr.bf16.mxu0 0
        %971 = vmatpush1.bf16.msra.mxu0 0
        %972 = vmatprep.subr.bf16.mxu0 0
        %973 = vmatpush1.bf16.msra.mxu0 0
        %974 = vmatprep.subr.bf16.mxu0 0
        %975 = vmatpush1.bf16.msra.mxu0 0
        %976 = vmatprep.subr.bf16.mxu0 0
        %977 = vmatpush1.bf16.msra.mxu0 0
        %978 = vmatprep.subr.bf16.mxu0 0
        %979 = vmatpush1.bf16.msra.mxu0 0
        %980 = vmatprep.subr.bf16.mxu0 0
        %981 = vmatpush1.bf16.msra.mxu0 0
        %982 = vmatprep.subr.bf16.mxu0 0
        %983 = vmatpush1.bf16.msra.mxu0 0
        %984 = vmatprep.subr.bf16.mxu0 0
        %985 = vmatpush1.bf16.msra.mxu0 0
        %986 = vmatprep.subr.bf16.mxu0 0
        %987 = vmatpush1.bf16.msra.mxu0 0
        %988 = vmatprep.subr.bf16.mxu0 0
        %989 = vmatpush1.bf16.msra.mxu0 0
        %990 = vmatprep.subr.bf16.mxu0 0
        %991 = vmatpush1.bf16.msra.mxu0 0
        %992 = vmatprep.mubr.bf16.mxu0 0
        %993 = vmatmul.mubr.bf16.gmra.mrb[0].mxu0 %v945
        %v994 = vpop.f32.mrb[0].mxu0
        %v995 = vadd.f32 0.0, %v994
        %v996 = vpop.f32.mrb[0].mxu0
        %v997 = vpop.f32.mrb[0].mxu0
        %v998 = vadd.f32 0.0, %v997
        %v999 = vpop.f32.mrb[0].mxu0
        %1000 = vmatprep.mubr.bf16.mxu0 0
        %1001 = vmatmul.mubr.bf16.gmra.mrb[0].mxu0 %v948
        %v1002 = vpop.f32.mrb[0].mxu0
        %v1003 = vadd.f32 0.0, %v1002
        %v1004 = vpop.f32.mrb[0].mxu0
        %v1005 = vpop.f32.mrb[0].mxu0
        %v1006 = vadd.f32 0.0, %v1005
        %v1007 = vpop.f32.mrb[0].mxu0
        %1008 = vmatprep.mubr.bf16.mxu0 0
        %1009 = vmatmul.mubr.bf16.gmra.mrb[0].mxu0 %v951
        %v1010 = vpop.f32.mrb[0].mxu0
        %v1011 = vadd.f32 0.0, %v1010
        %v1012 = vpop.f32.mrb[0].mxu0
        %v1013 = vpop.f32.mrb[0].mxu0
        %v1014 = vadd.f32 0.0, %v1013
        %v1015 = vpop.f32.mrb[0].mxu0
        %1016 = vmatprep.mubr.bf16.mxu0 0
        %1017 = vmatmul.mubr.bf16.gmra.mrb[0].mxu0 %v954
        %v1018 = vpop.f32.mrb[0].mxu0
        %v1019 = vadd.f32 0.0, %v1018
        %v1020 = vpop.f32.mrb[0].mxu0
        %v1021 = vpop.f32.mrb[0].mxu0
        %v1022 = vadd.f32 0.0, %v1021
        %v1023 = vpop.f32.mrb[0].mxu0
        %1024 = vdwg.mxu0
        %1025 = vst [vmem:[%s163] sm:$0xff] %v995
        %1026 = vst [vmem:[%s163 + $0x8] sm:$0xff] %v998
        %1027 = vst [vmem:[%s163 + $0x10] sm:$0xff] %v1003
        %1028 = vst [vmem:[%s163 + $0x18] sm:$0xff] %v1006
        %1029 = vst [vmem:[%s163 + $0x20] sm:$0xff] %v1011
        %1030 = vst [vmem:[%s163 + $0x28] sm:$0xff] %v1014
        %1031 = vst [vmem:[%s163 + $0x30] sm:$0xff] %v1019
        %1032 = vst [vmem:[%s163 + $0x38] sm:$0xff] %v1022
        %s1033 = sand.u32 %s90, 1
        %s1034 = scalar_lea.sflag [#allocation4], %s1033
        %s1035 = sand.u32 %s90, 1
        %s1036 = smul.addr %s1035, 64
        %s1037 = scalar_lea.vmem [#allocation3], %s1036
        // Predicated region
        $region33: #{tpu_custom_call.1} parent=27 // pred_check
          %p1038 = pneg %p100
        $region34: #{tpu_custom_call.1} parent=27 // pred_check_branch
          %1040 = sbr.rel (%p1038) target = $region36
        $region35: #{tpu_custom_call.1} parent=27 // pred_region
          %s1042 = ssub.s32 1024, 1024
          %1043 = vsyncadd %s1034, %s1042
          %s1044 = smul.addr %s20, 8
          %s1045 = sadd.s32 %s21, %s1044
          %s1046 = smul.addr %s1045, 128
          %s1047 = scalar_lea.hbm %s2, %s1046
          %s1048 = sshll.u32 %s1037, 4
          %s1049 = int_to_ptr.vmem [resolvable:$true] %s1048
          %1054 = dma.vmem_to_hbm [thread:$0]  %s1049, 1024, %s1047, %s1034, 128, 128, 8
        $region36: #{tpu_custom_call.1} parent=27 // pred_fallthru
          _
      $region28: #{tpu_custom_call.1} parent=5 // pred_fallthru
        _
      %p1055 = scmp.le.s32.totalorder 2, %s11
      // Predicated region
      $region37: #{tpu_custom_call.1} parent=5 // pred_check
        %p1056 = pneg %p1055
      $region38: #{tpu_custom_call.1} parent=5 // pred_check_branch
        %1058 = sbr.rel (%p1056) target = $region40
      $region39: #{tpu_custom_call.1} parent=5 // pred_region
        %s1059 = ssub.s32 %s11, 2
        // Predicated region
        $region41: #{tpu_custom_call.1} parent=39 // pred_check
          %p1060 = pneg %p106
        $region42: #{tpu_custom_call.1} parent=39 // pred_check_branch
          %1062 = sbr.rel (%p1060) target = $region44
        $region43: #{tpu_custom_call.1} parent=39 // pred_region
          %s1063 = sand.u32 %s91, 1
          %s1064 = scalar_lea.sflag [#allocation4], %s1063
          %s1065 = sand.u32 %s91, 1
          %s1066 = smul.addr %s1065, 64
          %s1067 = scalar_lea.vmem [#allocation3], %s1066
          %1068 = dma.done %s1064, 1024
        $region44: #{tpu_custom_call.1} parent=39 // pred_fallthru
          _
      $region40: #{tpu_custom_call.1} parent=5 // pred_fallthru
        _
    $region6: #{tpu_custom_call.1} parent=1 // loop_footer
      %s15 = sadd.s32 1, %s11
    $region7: #{tpu_custom_call.1} parent=1 // loop_footer_branch
      %10 = sbr.rel target = $region3
    $region8: #{tpu_custom_call.1} parent=1 // loop_exit
      _
    %1069 = vsyncpa [#allocation4], 1
    %s1070 = scalar_lea.sflag [#allocation4], 1
    %1071 = vsyncpa %s1070, 1

</llo_original>
